<compile_context>
chip_gen: v7x
topology: tpu7x:2x2x1
jax: 0.10.0
libtpu: 0.0.40
codegen_flags: <defaults>
</compile_context>

<pallas_src>
import functools

import jax
import jax.numpy as jnp
from jax.experimental import pallas as pl
from jax.experimental.pallas import tpu as pltpu


def _cosine_kernel(x_ref, v_ref, g_ref, o_ref,
                   acc_ref, xsq_ref, vsq_ref, *, scale, eps):
    k = pl.program_id(2)

    @pl.when(k == 0)
    def _init():
        acc_ref[...] = jnp.zeros_like(acc_ref)
        xsq_ref[...] = jnp.zeros_like(xsq_ref)
        vsq_ref[...] = jnp.zeros_like(vsq_ref)

    x = x_ref[...].astype(jnp.float32)            # (tm, tk)
    v = v_ref[...].astype(jnp.float32)            # (tn, tk)  (PyTorch layout)

    # Main MXU accumulate: contract over in_features (last dim of both operands).
    acc_ref[...] += jax.lax.dot_general(
        x, v,
        dimension_numbers=(((1,), (1,)), ((), ())),
        preferred_element_type=jnp.float32)

    # Row-wise sum of squares of x (for x L2 norm), accumulated over K tiles.
    xsq_ref[...] += jnp.sum(x * x, axis=1, keepdims=True)     # (tm, 1)

    # Per-output-row sum of squares of v, kept lane-oriented (rows identical)
    # via a tiny ones-matmul so no cross-lane transpose is needed.
    ones_row = jnp.ones((8, v.shape[1]), jnp.float32)
    vsq_ref[...] += jax.lax.dot_general(
        ones_row, v * v,
        dimension_numbers=(((1,), (1,)), ((), ())),
        preferred_element_type=jnp.float32)                   # (8, tn)

    @pl.when(k == pl.num_programs(2) - 1)
    def _finalize():
        inv_xnorm = 1.0 / (jnp.sqrt(xsq_ref[...]) + eps)      # (tm, 1)
        vnorm = jnp.sqrt(vsq_ref[0:1, :])                     # (1, tn)
        g = g_ref[...].astype(jnp.float32)                    # (1, tn)
        # Guard the padded (all-zero) weight rows.
        w_scale = jnp.where(vnorm > 0.0, g / vnorm, 0.0)      # (1, tn)
        o_ref[...] = (scale * acc_ref[...] * inv_xnorm * w_scale).astype(o_ref.dtype)


def _round_up(a, b):
    return ((a + b - 1) // b) * b


def cosine_layer_forward(x, weight_v, weight_g, *,
                         scale_factor=2.0, eps=1e-4,
                         tm_max=256, tn_max=256, tk_max=256):
    """x: (B, in) f32; weight_v: (out, in) f32 (PyTorch layout); weight_g: (out,) f32."""
    M, K = x.shape
    N, Kw = weight_v.shape
    assert K == Kw
    assert weight_g.shape == (N,)

    # Tile sizes: tm multiple of 8, tn/tk multiples of 128 (lane-dense output),
    # capped at 256 so double-buffered blocks fit comfortably in scoped VMEM on
    # v5e / v6e / v7x alike.
    tm = min(_round_up(M, 8), tm_max)
    tn = min(_round_up(N, 128), tn_max)
    tk = min(_round_up(K, 128), tk_max)

    Mp, Np, Kp = _round_up(M, tm), _round_up(N, tn), _round_up(K, tk)

    xp = x if (Mp, Kp) == (M, K) else jnp.pad(x, ((0, Mp - M), (0, Kp - K)))
    vp = weight_v if (Np, Kp) == (N, K) else jnp.pad(
        weight_v, ((0, Np - N), (0, Kp - K)))
    gp = weight_g if Np == N else jnp.pad(weight_g, (0, Np - N))
    g2 = gp.reshape(1, Np)

    grid = (Mp // tm, Np // tn, Kp // tk)

    out = pl.pallas_call(
        functools.partial(_cosine_kernel, scale=scale_factor, eps=eps),
        out_shape=jax.ShapeDtypeStruct((Mp, Np), x.dtype),
        grid_spec=pltpu.PrefetchScalarGridSpec(
            num_scalar_prefetch=0,
            grid=grid,
            in_specs=[
                pl.BlockSpec((tm, tk), lambda i, j, k: (i, k)),   # x
                pl.BlockSpec((tn, tk), lambda i, j, k: (j, k)),   # weight_v (no transpose)
                pl.BlockSpec((1, tn), lambda i, j, k: (0, j)),    # weight_g
            ],
            out_specs=pl.BlockSpec((tm, tn), lambda i, j, k: (i, j)),
            scratch_shapes=[
                pltpu.VMEM((tm, tn), jnp.float32),   # matmul accumulator
                pltpu.VMEM((tm, 1), jnp.float32),    # sum(x^2) per row
                pltpu.VMEM((8, tn), jnp.float32),    # sum(v^2) per output row (lane-oriented)
            ],
        ),
        compiler_params=pltpu.CompilerParams(
            dimension_semantics=("parallel", "parallel", "arbitrary"),
            vmem_limit_bytes=32 * 1024 * 1024,
        ),
    )(xp, vp, g2)

    return out[:M, :N]


if __name__ == "__main__":
    key = jax.random.PRNGKey(0)
    kx, kv, kg = jax.random.split(key, 3)

    B, in_features, out_features = 16, 300, 48   # exercises K/N padding + 2 K steps

    x = jax.random.normal(kx, (B, in_features), dtype=jnp.float32)
    # WeightNorm parameters: v (unnormalized direction), g (per-output-row gain).
    weight_v = jax.random.normal(kv, (out_features, in_features),
                                 dtype=jnp.float32) * 0.1
    weight_g = jax.random.uniform(kg, (out_features,),
                                  minval=0.5, maxval=1.5, dtype=jnp.float32)

    y = cosine_layer_forward(x, weight_v, weight_g)
    jax.block_until_ready(y)

    # Pure-JAX reference of the PyTorch forward.
    x_norm = jnp.sqrt(jnp.sum(x * x, axis=1, keepdims=True))
    x_n = x / (x_norm + 1e-4)
    v_norm = jnp.sqrt(jnp.sum(weight_v * weight_v, axis=1, keepdims=True))
    w_eff = weight_g[:, None] * weight_v / v_norm
    y_ref = 2.0 * (x_n @ w_eff.T)

    assert y.shape == (B, out_features)
    assert jnp.allclose(y, y_ref, atol=1e-4, rtol=1e-4), float(
        jnp.max(jnp.abs(y - y_ref)))

    print("KERNEL_OK")
</pallas_src>

<mosaic_0001>
module attributes {stable_mosaic.version = 11 : i64} {
  func.func @_cosine_kernel(%arg0: i32, %arg1: i32, %arg2: i32, %arg3: memref<16x256xf32, #tpu.memory_space<vmem>>, %arg4: memref<128x256xf32, #tpu.memory_space<vmem>>, %arg5: memref<1x128xf32, #tpu.memory_space<vmem>>, %arg6: memref<16x128xf32, #tpu.memory_space<vmem>>, %arg7: memref<16x128xf32, #tpu.memory_space<vmem>>, %arg8: memref<16x1xf32, #tpu.memory_space<vmem>>, %arg9: memref<8x128xf32, #tpu.memory_space<vmem>>) attributes {dimension_semantics = [#tpu.dimension_semantics<parallel>, #tpu.dimension_semantics<parallel>, #tpu.dimension_semantics<arbitrary>], iteration_bounds = array<i64: 1, 1, 2>, scalar_prefetch = 0 : i64, scratch_operands = 3 : i64, tpu.core_type = #tpu.core_type<tc>, window_params = [{transform_indices = @transform_0, window_bounds = array<i64: 16, 256>}, {transform_indices = @transform_1, window_bounds = array<i64: 128, 256>}, {transform_indices = @transform_2, window_bounds = array<i64: 1, 128>}, {transform_indices = @transform_3, window_bounds = array<i64: 16, 128>}]} {
    %c0_i32 = arith.constant 0 : i32
    %0 = arith.cmpi eq, %arg2, %c0_i32 : i32
    %1 = arith.extui %0 : i1 to i32
    %c0_i32_0 = arith.constant 0 : i32
    %2 = arith.cmpi ne, %1, %c0_i32_0 : i32
    scf.if %2 {
      %cst_20 = arith.constant 0.000000e+00 : f32
      %24 = vector.broadcast %cst_20 : f32 to vector<16x128xf32>
      %c0_21 = arith.constant 0 : index
      %c0_22 = arith.constant 0 : index
      %25 = vector.load %arg7[%c0_21, %c0_22] : memref<16x128xf32, #tpu.memory_space<vmem>>, vector<16x128xf32>
      tpu.vector_store %arg7[%c0_21, %c0_22], %24 {strides = array<i32>} : memref<16x128xf32, #tpu.memory_space<vmem>>, vector<16x128xf32>,
      %cst_23 = arith.constant 0.000000e+00 : f32
      %26 = vector.broadcast %cst_23 : f32 to vector<16x1xf32>
      %c0_24 = arith.constant 0 : index
      %c0_25 = arith.constant 0 : index
      %27 = vector.load %arg8[%c0_24, %c0_25] : memref<16x1xf32, #tpu.memory_space<vmem>>, vector<16x1xf32>
      tpu.vector_store %arg8[%c0_24, %c0_25], %26 {strides = array<i32>} : memref<16x1xf32, #tpu.memory_space<vmem>>, vector<16x1xf32>,
      %cst_26 = arith.constant 0.000000e+00 : f32
      %28 = vector.broadcast %cst_26 : f32 to vector<8x128xf32>
      %c0_27 = arith.constant 0 : index
      %c0_28 = arith.constant 0 : index
      %29 = vector.load %arg9[%c0_27, %c0_28] : memref<8x128xf32, #tpu.memory_space<vmem>>, vector<8x128xf32>
      tpu.vector_store %arg9[%c0_27, %c0_28], %28 {strides = array<i32>} : memref<8x128xf32, #tpu.memory_space<vmem>>, vector<8x128xf32>,
    } else {
    }
    %c0 = arith.constant 0 : index
    %c0_1 = arith.constant 0 : index
    %3 = vector.load %arg3[%c0, %c0_1] : memref<16x256xf32, #tpu.memory_space<vmem>>, vector<16x256xf32>
    %c0_2 = arith.constant 0 : index
    %c0_3 = arith.constant 0 : index
    %4 = vector.load %arg4[%c0_2, %c0_3] : memref<128x256xf32, #tpu.memory_space<vmem>>, vector<128x256xf32>
    %c0_4 = arith.constant 0 : index
    %c0_5 = arith.constant 0 : index
    %5 = vector.load %arg7[%c0_4, %c0_5] : memref<16x128xf32, #tpu.memory_space<vmem>>, vector<16x128xf32>
    %cst = arith.constant dense<0.000000e+00> : vector<16x128xf32>
    %6 = tpu.matmul %3, %4, %cst {dimension_numbers = #tpu.dot_dimension_numbers<[1], [1], [0], [0], [0, 0, 1, 0], [], []>} : vector<16x256xf32>, vector<128x256xf32>, vector<16x128xf32> -> vector<16x128xf32>
    %7 = arith.addf %5, %6 : vector<16x128xf32>
    %c0_6 = arith.constant 0 : index
    %c0_7 = arith.constant 0 : index
    %8 = vector.load %arg7[%c0_6, %c0_7] : memref<16x128xf32, #tpu.memory_space<vmem>>, vector<16x128xf32>
    tpu.vector_store %arg7[%c0_6, %c0_7], %7 {strides = array<i32>} : memref<16x128xf32, #tpu.memory_space<vmem>>, vector<16x128xf32>,
    %c0_8 = arith.constant 0 : index
    %c0_9 = arith.constant 0 : index
    %9 = vector.load %arg8[%c0_8, %c0_9] : memref<16x1xf32, #tpu.memory_space<vmem>>, vector<16x1xf32>
    %10 = arith.mulf %3, %3 : vector<16x256xf32>
    %cst_10 = arith.constant dense<0.000000e+00> : vector<16xf32>
    %11 = vector.multi_reduction <add>, %10, %cst_10 [1] : vector<16x256xf32> to vector<16xf32>
    %12 = vector.shape_cast %11 : vector<16xf32> to vector<16x1xf32>
    %13 = arith.addf %9, %12 : vector<16x1xf32>
    %c0_11 = arith.constant 0 : index
    %c0_12 = arith.constant 0 : index
    %14 = vector.load %arg8[%c0_11, %c0_12] : memref<16x1xf32, #tpu.memory_space<vmem>>, vector<16x1xf32>
    tpu.vector_store %arg8[%c0_11, %c0_12], %13 {strides = array<i32>} : memref<16x1xf32, #tpu.memory_space<vmem>>, vector<16x1xf32>,
    %cst_13 = arith.constant 1.000000e+00 : f32
    %15 = vector.broadcast %cst_13 : f32 to vector<8x256xf32>
    %c0_14 = arith.constant 0 : index
    %c0_15 = arith.constant 0 : index
    %16 = vector.load %arg9[%c0_14, %c0_15] : memref<8x128xf32, #tpu.memory_space<vmem>>, vector<8x128xf32>
    %17 = arith.mulf %4, %4 : vector<128x256xf32>
    %cst_16 = arith.constant dense<0.000000e+00> : vector<8x128xf32>
    %18 = tpu.matmul %15, %17, %cst_16 {dimension_numbers = #tpu.dot_dimension_numbers<[1], [1], [0], [0], [0, 0, 1, 0], [], []>} : vector<8x256xf32>, vector<128x256xf32>, vector<8x128xf32> -> vector<8x128xf32>
    %19 = arith.addf %16, %18 : vector<8x128xf32>
    %c0_17 = arith.constant 0 : index
    %c0_18 = arith.constant 0 : index
    %20 = vector.load %arg9[%c0_17, %c0_18] : memref<8x128xf32, #tpu.memory_space<vmem>>, vector<8x128xf32>
    tpu.vector_store %arg9[%c0_17, %c0_18], %19 {strides = array<i32>} : memref<8x128xf32, #tpu.memory_space<vmem>>, vector<8x128xf32>,
    %c1_i32 = arith.constant 1 : i32
    %21 = arith.cmpi eq, %arg2, %c1_i32 : i32
    %22 = arith.extui %21 : i1 to i32
    %c0_i32_19 = arith.constant 0 : i32
    %23 = arith.cmpi ne, %22, %c0_i32_19 : i32
    scf.if %23 {
      %c0_20 = arith.constant 0 : index
      %c0_21 = arith.constant 0 : index
      %24 = vector.load %arg8[%c0_20, %c0_21] : memref<16x1xf32, #tpu.memory_space<vmem>>, vector<16x1xf32>
      %25 = math.sqrt %24 : vector<16x1xf32>
      %cst_22 = arith.constant 9.99999974E-5 : f32
      %26 = vector.broadcast %cst_22 : f32 to vector<16x1xf32>
      %27 = arith.addf %25, %26 : vector<16x1xf32>
      %cst_23 = arith.constant 1.000000e+00 : f32
      %28 = vector.broadcast %cst_23 : f32 to vector<16x1xf32>
      %29 = arith.divf %28, %27 : vector<16x1xf32>
      %c0_24 = arith.constant 0 : index
      %c0_25 = arith.constant 0 : index
      %30 = vector.load %arg9[%c0_24, %c0_25] : memref<8x128xf32, #tpu.memory_space<vmem>>, vector<1x128xf32>
      %31 = math.sqrt %30 : vector<1x128xf32>
      %c0_26 = arith.constant 0 : index
      %c0_27 = arith.constant 0 : index
      %32 = vector.load %arg5[%c0_26, %c0_27] : memref<1x128xf32, #tpu.memory_space<vmem>>, vector<1x128xf32>
      %cst_28 = arith.constant 0.000000e+00 : f32
      %33 = vector.broadcast %cst_28 : f32 to vector<1x128xf32>
      %34 = arith.cmpf ogt, %31, %33 : vector<1x128xf32>
      %35 = arith.divf %32, %31 : vector<1x128xf32>
      %cst_29 = arith.constant 0.000000e+00 : f32
      %36 = vector.broadcast %cst_29 : f32 to vector<1x128xf32>
      %37 = arith.select %34, %35, %36 : vector<1x128xi1>, vector<1x128xf32>
      %c0_30 = arith.constant 0 : index
      %c0_31 = arith.constant 0 : index
      %38 = vector.load %arg7[%c0_30, %c0_31] : memref<16x128xf32, #tpu.memory_space<vmem>>, vector<16x128xf32>
      %cst_32 = arith.constant 2.000000e+00 : f32
      %39 = vector.broadcast %cst_32 : f32 to vector<16x128xf32>
      %40 = arith.mulf %39, %38 : vector<16x128xf32>
      %41 = vector.broadcast %29 : vector<16x1xf32> to vector<16x128xf32>
      %42 = arith.mulf %40, %41 : vector<16x128xf32>
      %43 = vector.broadcast %37 : vector<1x128xf32> to vector<16x128xf32>
      %44 = arith.mulf %42, %43 : vector<16x128xf32>
      %c0_33 = arith.constant 0 : index
      %c0_34 = arith.constant 0 : index
      %45 = vector.load %arg6[%c0_33, %c0_34] : memref<16x128xf32, #tpu.memory_space<vmem>>, vector<16x128xf32>
      tpu.vector_store %arg6[%c0_33, %c0_34], %44 {strides = array<i32>} : memref<16x128xf32, #tpu.memory_space<vmem>>, vector<16x128xf32>,
    } else {
    }
    return
  }
  func.func @transform_0(%arg0: i32, %arg1: i32, %arg2: i32) -> (i32, i32) {
    %c0_i32 = arith.constant 0 : i32
    return %arg0, %arg2 : i32, i32
  }
  func.func @transform_1(%arg0: i32, %arg1: i32, %arg2: i32) -> (i32, i32) {
    %c0_i32 = arith.constant 0 : i32
    return %arg1, %arg2 : i32, i32
  }
  func.func @transform_2(%arg0: i32, %arg1: i32, %arg2: i32) -> (i32, i32) {
    %c0_i32 = arith.constant 0 : i32
    %c0_i32_0 = arith.constant 0 : i32
    return %c0_i32, %arg1 : i32, i32
  }
  func.func @transform_3(%arg0: i32, %arg1: i32, %arg2: i32) -> (i32, i32) {
    %c0_i32 = arith.constant 0 : i32
    return %arg0, %arg1 : i32, i32
  }
}

</mosaic_0001>

<llo_original>
// kernel: tpu_custom_call.1
$region0: #{tpu_custom_call.1}
  #allocation0 [shape = 'u32[]', space=smem, size = 0x4, offset = 0x4, fixed_abs, tag = 'smem constant byte address 0x4 - core index']
  #allocation1 [shape = 'u32[144,128]{1,0:T(1,128)}', space=vmem, size = 0x12000, scoped, tag = 'internal scratch']
  #allocation2 [shape = 'f32[16,128]{1,0:T(8,128)}', space=vmem, size = 0x2000, scoped, tag = 'scratch operand']
  #allocation3 [shape = 'f32[16,1]{1,0:T(8,128)}', space=vmem, size = 0x2000, scoped, tag = 'scratch operand']
  #allocation4 [shape = 'f32[8,128]{1,0:T(8,128)}', space=vmem, size = 0x1000, scoped, tag = 'scratch operand']
  %s0 = inlined_call_operand.hbm [shape: f32[16,512], index: 0, kind: input, shape index: {}]
  %s1 = inlined_call_operand.hbm [shape: f32[128,512], index: 1, kind: input, shape index: {}]
  %s2 = inlined_call_operand.vmem [shape: f32[1,128], index: 2, kind: input, shape index: {}]
  %s3 = inlined_call_operand.hbm [shape: f32[16,128], index: 3, kind: output, shape index: {}]
  %s4 = sld [smem:[#allocation0]]
  $region61: #{tpu_custom_call.1} parent=0
    _
  %s6 = ssub.s32 1, %s4
  %s7 = scalar_select 0, %s6, %s4
  $region1: #{tpu_custom_call.1} parent=0
    #allocation5 [shape = 'u8[32768]{0}', space=vmem, size = 0x8000, scoped, tag = 'input window, operand 0']
    #allocation6 [shape = 's32[2]{0}', space=sflag, size = 0x8, scoped, tag = 'scoped memory for tpu_custom_call.1']
    #allocation7 [shape = 's32[2]{0}', space=sflag, size = 0x8, scoped, tag = 'scoped memory for tpu_custom_call.1']
    #allocation8 [shape = 'u8[262144]{0}', space=vmem, size = 0x40000, scoped, tag = 'input window, operand 1']
    #allocation9 [shape = 's32[2]{0}', space=sflag, size = 0x8, scoped, tag = 'scoped memory for tpu_custom_call.1']
    #allocation10 [shape = 'u8[8192]{0}', space=vmem, size = 0x2000, scoped, tag = 'output window, operand 0, single buffered']
    %8 = vsyncpa [#allocation6], 0
    %s9 = scalar_lea.sflag [#allocation6], 1
    %10 = vsyncpa %s9, 0
    %11 = vsyncpa [#allocation9], 0
    %s12 = scalar_lea.sflag [#allocation9], 1
    %13 = vsyncpa %s12, 0
    %14 = vsyncpa [#allocation7], 0
    loop: start=0, step=1, limit=4
    $region2: #{tpu_custom_call.1} parent=1 // loop_pre_header
      _
    $region3: #{tpu_custom_call.1} parent=1 // loop_header
      %s16 = sphi 0, %s20
      %p17 = scmp.ge.s32.totalorder %s16, 4
      %s23 = sphi 0, %s42
      %s24 = sphi 0, %s38
      %s25 = sphi 0, %s34
      %s26 = sphi 0, %s23
      %s27 = sphi 0, %s24
      %s28 = sphi 0, %s25
      %s29 = sphi 0, %s26
      %s30 = sphi 0, %s27
      %s31 = sphi 0, %s28
      %s47 = sphi 0, %s49
      %s50 = sphi 0, %s47
      %s51 = sphi 0, %s50
      %s67 = sphi 0, %s51
      %s75 = sphi 0, %s77
      %s78 = sphi 0, %s75
      %s79 = sphi 0, %s78
      %s95 = sphi 0, %s79
      %s101 = sphi 0, %s103
      %s104 = sphi 0, %s101
      %s105 = sphi 0, %s104
      %s121 = sphi 0, %s105
      %s129 = sphi 0, %s131
      %s132 = sphi 0, %s129
      %s133 = sphi 0, %s132
      %s149 = sphi 0, %s133
    $region4: #{tpu_custom_call.1} parent=1 // loop_header_branch
      %19 = sbr.rel (%p17) target = $region8
    $region5: #{tpu_custom_call.1} parent=1 // loop_body
      %s21 = ssub.s32 %s16, 1
      %s22 = ssub.s32 %s16, 2
      %s32 = sadd.s32 1, %s25
      %p33 = scmp.ge.s32.totalorder %s32, 2
      %s34 = scalar_select %p33, 0, %s32
      %s35 = sadd.s32 1, %s24
      %s36 = scalar_select %p33, %s35, %s24
      %p37 = scmp.ge.s32.totalorder %s36, 1
      %s38 = scalar_select %p37, 0, %s36
      %s39 = sadd.s32 1, %s23
      %s40 = scalar_select %p37, %s39, %s23
      %p41 = scmp.ge.s32.totalorder %s40, 1
      %s42 = scalar_select %p41, 0, %s40
      %s43 = ssub.s32 %s23, %s42
      %s44 = ssub.s32 %s25, %s34
      %s45 = sor.u32 %s43, %s44
      %p46 = scmp.eq.s32.totalorder %s45, 0
      %s48 = sadd.s32 %s47, 1
      %s49 = scalar_select %p46, %s47, %s48
      %p52 = pneg %p46
      %p53 = scmp.eq.s32.totalorder %s16, 1
      %p54 = por %p52, %p53
      %p55 = scmp.ne.s32.totalorder %s47, %s50
      %p56 = scmp.eq.s32.totalorder %s16, 0
      %p57 = por %p55, %p56
      %p58 = scmp.ne.s32.totalorder %s47, %s50
      %p59 = scmp.eq.s32.totalorder %s21, 1
      %p60 = por %p58, %p59
      %p61 = scmp.ne.s32.totalorder %s50, %s51
      %p62 = scmp.eq.s32.totalorder %s21, 0
      %p63 = por %p61, %p62
      %p64 = scmp.ne.s32.totalorder %s50, %s51
      %p65 = scmp.eq.s32.totalorder %s22, 1
      %p66 = por %p64, %p65
      %p68 = scmp.ne.s32.totalorder %s51, %s67
      %p69 = scmp.eq.s32.totalorder %s22, 0
      %p70 = por %p68, %p69
      %s71 = ssub.s32 %s24, %s38
      %s72 = ssub.s32 %s25, %s34
      %s73 = sor.u32 %s71, %s72
      %p74 = scmp.eq.s32.totalorder %s73, 0
      %s76 = sadd.s32 %s75, 1
      %s77 = scalar_select %p74, %s75, %s76
      %p80 = pneg %p74
      %p81 = scmp.eq.s32.totalorder %s16, 1
      %p82 = por %p80, %p81
      %p83 = scmp.ne.s32.totalorder %s75, %s78
      %p84 = scmp.eq.s32.totalorder %s16, 0
      %p85 = por %p83, %p84
      %p86 = scmp.ne.s32.totalorder %s75, %s78
      %p87 = scmp.eq.s32.totalorder %s21, 1
      %p88 = por %p86, %p87
      %p89 = scmp.ne.s32.totalorder %s78, %s79
      %p90 = scmp.eq.s32.totalorder %s21, 0
      %p91 = por %p89, %p90
      %p92 = scmp.ne.s32.totalorder %s78, %s79
      %p93 = scmp.eq.s32.totalorder %s22, 1
      %p94 = por %p92, %p93
      %p96 = scmp.ne.s32.totalorder %s79, %s95
      %p97 = scmp.eq.s32.totalorder %s22, 0
      %p98 = por %p96, %p97
      %s99 = ssub.s32 %s24, %s38
      %p100 = scmp.eq.s32.totalorder %s99, 0
      %s102 = sadd.s32 %s101, 1
      %s103 = scalar_select %p100, %s101, %s102
      %p106 = pneg %p100
      %p107 = scmp.eq.s32.totalorder %s16, 1
      %p108 = por %p106, %p107
      %p109 = scmp.ne.s32.totalorder %s101, %s104
      %p110 = scmp.eq.s32.totalorder %s16, 0
      %p111 = por %p109, %p110
      %p112 = scmp.ne.s32.totalorder %s101, %s104
      %p113 = scmp.eq.s32.totalorder %s21, 1
      %p114 = por %p112, %p113
      %p115 = scmp.ne.s32.totalorder %s104, %s105
      %p116 = scmp.eq.s32.totalorder %s21, 0
      %p117 = por %p115, %p116
      %p118 = scmp.ne.s32.totalorder %s104, %s105
      %p119 = scmp.eq.s32.totalorder %s22, 1
      %p120 = por %p118, %p119
      %p122 = scmp.ne.s32.totalorder %s105, %s121
      %p123 = scmp.eq.s32.totalorder %s22, 0
      %p124 = por %p122, %p123
      %s125 = ssub.s32 %s23, %s42
      %s126 = ssub.s32 %s24, %s38
      %s127 = sor.u32 %s125, %s126
      %p128 = scmp.eq.s32.totalorder %s127, 0
      %s130 = sadd.s32 %s129, 1
      %s131 = scalar_select %p128, %s129, %s130
      %p134 = pneg %p128
      %p135 = scmp.eq.s32.totalorder %s16, 1
      %p136 = por %p134, %p135
      %p137 = scmp.ne.s32.totalorder %s129, %s132
      %p138 = scmp.eq.s32.totalorder %s16, 0
      %p139 = por %p137, %p138
      %p140 = scmp.ne.s32.totalorder %s129, %s132
      %p141 = scmp.eq.s32.totalorder %s21, 1
      %p142 = por %p140, %p141
      %p143 = scmp.ne.s32.totalorder %s132, %s133
      %p144 = scmp.eq.s32.totalorder %s21, 0
      %p145 = por %p143, %p144
      %p146 = scmp.ne.s32.totalorder %s132, %s133
      %p147 = scmp.eq.s32.totalorder %s22, 1
      %p148 = por %p146, %p147
      %p150 = scmp.ne.s32.totalorder %s133, %s149
      %p151 = scmp.eq.s32.totalorder %s22, 0
      %p152 = por %p150, %p151
      %p153 = scmp.le.s32.totalorder 1, %s16
      %p154 = scmp.lt.s32.totalorder %s16, 3
      %p155 = pnand %p153, %p154
      %p156 = pneg %p155
      // Predicated region
      $region9: #{tpu_custom_call.1} parent=5 // pred_check
        _
      $region10: #{tpu_custom_call.1} parent=5 // pred_check_branch
        %158 = sbr.rel (%p155) target = $region12
      $region11: #{tpu_custom_call.1} parent=5 // pred_region
        %s159 = ssub.s32 %s16, 1
        // Predicated region
        $region13: #{tpu_custom_call.1} parent=11 // pred_check
          %p160 = pneg %p117
        $region14: #{tpu_custom_call.1} parent=11 // pred_check_branch
          %162 = sbr.rel (%p160) target = $region16
        $region15: #{tpu_custom_call.1} parent=11 // pred_region
          %p163 = scmp.lt.s32.totalorder %s27, 0
          %s164 = scalar_select %p163, %s27, 0
          %s165 = scalar_lea.vmem %s2, %s164
        $region16: #{tpu_custom_call.1} parent=11 // pred_fallthru
          _
      $region12: #{tpu_custom_call.1} parent=5 // pred_fallthru
        _
      %p166 = scmp.lt.s32.totalorder %s16, 2
      // Predicated region
      $region17: #{tpu_custom_call.1} parent=5 // pred_check
        %p167 = pneg %p166
      $region18: #{tpu_custom_call.1} parent=5 // pred_check_branch
        %169 = sbr.rel (%p167) target = $region20
      $region19: #{tpu_custom_call.1} parent=5 // pred_region
        // Predicated region
        $region21: #{tpu_custom_call.1} parent=19 // pred_check
          %p170 = pneg %p57
        $region22: #{tpu_custom_call.1} parent=19 // pred_check_branch
          %172 = sbr.rel (%p170) target = $region24
        $region23: #{tpu_custom_call.1} parent=19 // pred_region
          %s173 = sand.u32 %s47, 1
          %s174 = scalar_lea.sflag [#allocation6], %s173
          %s175 = sand.u32 %s47, 1
          %s176 = smul.addr %s175, 32
          %s177 = scalar_lea.vmem [#allocation5], %s176
          %s178 = smul.u32 2, %s23
          %s179 = smul.u32 2, %s25
          %s181 = ssub.s32 512, 512
          %182 = vsyncadd %s174, %s181
          %s183 = smul.addr %s178, 4
          %s184 = sadd.s32 %s179, %s183
          %s185 = smul.addr %s184, 128
          %s186 = scalar_lea.hbm %s0, %s185
          %s187 = sshll.u32 %s177, 4
          %s188 = int_to_ptr.vmem [resolvable:$true] %s187
          %193 = dma.hbm_to_vmem [thread:$0]  %s186, 512, %s188, %s174, 512, 256, 16
        $region24: #{tpu_custom_call.1} parent=19 // pred_fallthru
          _
        // Predicated region
        $region25: #{tpu_custom_call.1} parent=19 // pred_check
          %p194 = pneg %p85
        $region26: #{tpu_custom_call.1} parent=19 // pred_check_branch
          %196 = sbr.rel (%p194) target = $region28
        $region27: #{tpu_custom_call.1} parent=19 // pred_region
          %s197 = sand.u32 %s75, 1
          %s198 = scalar_lea.sflag [#allocation9], %s197
          %s199 = sand.u32 %s75, 1
          %s200 = smul.addr %s199, 256
          %s201 = scalar_lea.vmem [#allocation8], %s200
          %s202 = smul.u32 16, %s24
          %s203 = smul.u32 2, %s25
          %s205 = ssub.s32 4096, 4096
          %206 = vsyncadd %s198, %s205
          %s207 = smul.addr %s202, 4
          %s208 = sadd.s32 %s203, %s207
          %s209 = smul.addr %s208, 128
          %s210 = scalar_lea.hbm %s1, %s209
          %s211 = sshll.u32 %s201, 4
          %s212 = int_to_ptr.vmem [resolvable:$true] %s211
          %217 = dma.hbm_to_vmem [thread:$0]  %s210, 4096, %s212, %s198, 512, 256, 16
        $region28: #{tpu_custom_call.1} parent=19 // pred_fallthru
          _
      $region20: #{tpu_custom_call.1} parent=5 // pred_fallthru
        _
      %p218 = scmp.le.s32.totalorder 1, %s16
      %p219 = scmp.lt.s32.totalorder %s16, 3
      %p220 = pnand %p218, %p219
      %p221 = pneg %p220
      // Predicated region
      $region29: #{tpu_custom_call.1} parent=5 // pred_check
        _
      $region30: #{tpu_custom_call.1} parent=5 // pred_check_branch
        %223 = sbr.rel (%p220) target = $region32
      $region31: #{tpu_custom_call.1} parent=5 // pred_region
        %s224 = ssub.s32 %s16, 1
        %s225 = sand.u32 %s50, 1
        %s226 = scalar_lea.sflag [#allocation6], %s225
        %s227 = sand.u32 %s50, 1
        %s228 = smul.addr %s227, 32
        %s229 = scalar_lea.vmem [#allocation5], %s228
        // Predicated region
        $region33: #{tpu_custom_call.1} parent=31 // pred_check
          %p230 = pneg %p63
        $region34: #{tpu_custom_call.1} parent=31 // pred_check_branch
          %232 = sbr.rel (%p230) target = $region36
        $region35: #{tpu_custom_call.1} parent=31 // pred_region
          %233 = dma.done %s226, 512
        $region36: #{tpu_custom_call.1} parent=31 // pred_fallthru
          _
        %s234 = sand.u32 %s78, 1
        %s235 = scalar_lea.sflag [#allocation9], %s234
        %s236 = sand.u32 %s78, 1
        %s237 = smul.addr %s236, 256
        %s238 = scalar_lea.vmem [#allocation8], %s237
        // Predicated region
        $region37: #{tpu_custom_call.1} parent=31 // pred_check
          %p239 = pneg %p91
        $region38: #{tpu_custom_call.1} parent=31 // pred_check_branch
          %241 = sbr.rel (%p239) target = $region40
        $region39: #{tpu_custom_call.1} parent=31 // pred_region
          %242 = dma.done %s235, 4096
        $region40: #{tpu_custom_call.1} parent=31 // pred_fallthru
          _
        %s243 = sand.u32 %s50, 1
        %s244 = scalar_lea.sflag [#allocation6], %s243
        %s245 = sand.u32 %s50, 1
        %s246 = smul.addr %s245, 32
        %s247 = scalar_lea.vmem [#allocation5], %s246
        %p248 = pneg %p63
        %p249 = pneg %p60
        %s250 = sand.u32 %s78, 1
        %s251 = scalar_lea.sflag [#allocation9], %s250
        %s252 = sand.u32 %s78, 1
        %s253 = smul.addr %s252, 256
        %s254 = scalar_lea.vmem [#allocation8], %s253
        %p255 = pneg %p91
        %p256 = pneg %p88
        %p257 = scmp.lt.s32.totalorder %s27, 0
        %s258 = scalar_select %p257, %s27, 0
        %s259 = scalar_lea.vmem %s2, %s258
        %p260 = pneg %p117
        %p261 = pneg %p114
        %p262 = pneg %p145
        %p263 = pneg %p142
        %s264 = smul.u32 2, %s26
        %s265 = smul.u32 2, %s28
        %s266 = smul.u32 16, %s27
        %s267 = smul.u32 2, %s28
        %p268 = scmp.lt.s32.totalorder %s27, 0
        %s269 = scalar_select %p268, %s27, 0
        %s270 = scalar_lea.vmem %s2, %s269
        %s271 = smul.u32 2, %s26
        %p272 = scmp.eq.s32.totalorder %s28, 0
        // Predicated region
        $region41: #{tpu_custom_call.1} parent=31 // pred_check
          %p273 = pneg %p272
        $region42: #{tpu_custom_call.1} parent=31 // pred_check_branch
          %275 = sbr.rel (%p273) target = $region44
        $region43: #{tpu_custom_call.1} parent=31 // pred_region
          %276 = vst [vmem:[#allocation2] sm:$0xff] 0.0
          %277 = vst [vmem:[#allocation2 + $0x8] sm:$0xff] 0.0
          %vm278 = vcmask 7168
          %279 = vst.msk [vmem:[#allocation3] sm:$0xff] %vm278, 0.0
          %280 = vst.msk [vmem:[#allocation3 + $0x8] sm:$0xff] %vm278, 0.0
          %281 = vst [vmem:[#allocation4] sm:$0xff] 0.0
        $region44: #{tpu_custom_call.1} parent=31 // pred_fallthru
          _
        %v282 = vld [vmem:[%s229] sm:$0xff]
        %v283 = vld [vmem:[%s229 + $0x8] sm:$0xff]
        %v284 = vld [vmem:[%s229 + $0x10] sm:$0xff]
        %v285 = vld [vmem:[%s229 + $0x18] sm:$0xff]
        %v286 = vld [vmem:[%s238] sm:$0xff]
        %v287 = vld [vmem:[%s238 + $0x8] sm:$0xff]
        %v288 = vld [vmem:[%s238 + $0x10] sm:$0xff]
        %v289 = vld [vmem:[%s238 + $0x18] sm:$0xff]
        %v290 = vld [vmem:[%s238 + $0x20] sm:$0xff]
        %v291 = vld [vmem:[%s238 + $0x28] sm:$0xff]
        %v292 = vld [vmem:[%s238 + $0x30] sm:$0xff]
        %v293 = vld [vmem:[%s238 + $0x38] sm:$0xff]
        %v294 = vld [vmem:[%s238 + $0x40] sm:$0xff]
        %v295 = vld [vmem:[%s238 + $0x48] sm:$0xff]
        %v296 = vld [vmem:[%s238 + $0x50] sm:$0xff]
        %v297 = vld [vmem:[%s238 + $0x58] sm:$0xff]
        %v298 = vld [vmem:[%s238 + $0x60] sm:$0xff]
        %v299 = vld [vmem:[%s238 + $0x68] sm:$0xff]
        %v300 = vld [vmem:[%s238 + $0x70] sm:$0xff]
        %v301 = vld [vmem:[%s238 + $0x78] sm:$0xff]
        %v302 = vld [vmem:[%s238 + $0x80] sm:$0xff]
        %v303 = vld [vmem:[%s238 + $0x88] sm:$0xff]
        %v304 = vld [vmem:[%s238 + $0x90] sm:$0xff]
        %v305 = vld [vmem:[%s238 + $0x98] sm:$0xff]
        %v306 = vld [vmem:[%s238 + $0xa0] sm:$0xff]
        %v307 = vld [vmem:[%s238 + $0xa8] sm:$0xff]
        %v308 = vld [vmem:[%s238 + $0xb0] sm:$0xff]
        %v309 = vld [vmem:[%s238 + $0xb8] sm:$0xff]
        %v310 = vld [vmem:[%s238 + $0xc0] sm:$0xff]
        %v311 = vld [vmem:[%s238 + $0xc8] sm:$0xff]
        %v312 = vld [vmem:[%s238 + $0xd0] sm:$0xff]
        %v313 = vld [vmem:[%s238 + $0xd8] sm:$0xff]
        %v314 = vld [vmem:[%s238 + $0xe0] sm:$0xff]
        %v315 = vld [vmem:[%s238 + $0xe8] sm:$0xff]
        %v316 = vld [vmem:[%s238 + $0xf0] sm:$0xff]
        %v317 = vld [vmem:[%s238 + $0xf8] sm:$0xff]
        %v318 = vld [vmem:[#allocation2] sm:$0xff]
        %v319 = vld [vmem:[#allocation2 + $0x8] sm:$0xff]
        %320 = vmatprep.subr.mxu0 %v287
        %321 = vmatpush1.xpose.msra.mxu0 %v286
        %322 = vmatprep.subr.mxu0 %v289
        %323 = vmatpush1.xpose.msra.mxu0 %v288
        %324 = vmatprep.subr.mxu0 %v291
        %325 = vmatpush1.xpose.msra.mxu0 %v290
        %326 = vmatprep.subr.mxu0 %v293
        %327 = vmatpush1.xpose.msra.mxu0 %v292
        %328 = vmatprep.subr.mxu0 %v295
        %329 = vmatpush1.xpose.msra.mxu0 %v294
        %330 = vmatprep.subr.mxu0 %v297
        %331 = vmatpush1.xpose.msra.mxu0 %v296
        %332 = vmatprep.subr.mxu0 %v299
        %333 = vmatpush1.xpose.msra.mxu0 %v298
        %334 = vmatprep.subr.mxu0 %v301
        %335 = vmatpush1.xpose.msra.mxu0 %v300
        %336 = vmatprep.subr.mxu0 %v303
        %337 = vmatpush1.xpose.msra.mxu0 %v302
        %338 = vmatprep.subr.mxu0 %v305
        %339 = vmatpush1.xpose.msra.mxu0 %v304
        %340 = vmatprep.subr.mxu0 %v307
        %341 = vmatpush1.xpose.msra.mxu0 %v306
        %342 = vmatprep.subr.mxu0 %v309
        %343 = vmatpush1.xpose.msra.mxu0 %v308
        %344 = vmatprep.subr.mxu0 %v311
        %345 = vmatpush1.xpose.msra.mxu0 %v310
        %346 = vmatprep.subr.mxu0 %v313
        %347 = vmatpush1.xpose.msra.mxu0 %v312
        %348 = vmatprep.subr.mxu0 %v315
        %349 = vmatpush1.xpose.msra.mxu0 %v314
        %350 = vmatprep.subr.mxu0 %v317
        %351 = vmatpush1.xpose.msra.mxu0 %v316
        %352 = vmatprep.subr.mxu0 0.0
        %353 = vmatpush1.xpose.msra.mxu0 0.0
        %354 = vmatprep.subr.mxu0 0.0
        %355 = vmatpush1.xpose.msra.mxu0 0.0
        %356 = vmatprep.subr.mxu0 0.0
        %357 = vmatpush1.xpose.msra.mxu0 0.0
        %358 = vmatprep.subr.mxu0 0.0
        %359 = vmatpush1.xpose.msra.mxu0 0.0
        %360 = vmatprep.subr.mxu0 0.0
        %361 = vmatpush1.xpose.msra.mxu0 0.0
        %362 = vmatprep.subr.mxu0 0.0
        %363 = vmatpush1.xpose.msra.mxu0 0.0
        %364 = vmatprep.subr.mxu0 0.0
        %365 = vmatpush1.xpose.msra.mxu0 0.0
        %366 = vmatprep.subr.mxu0 0.0
        %367 = vmatpush1.xpose.msra.mxu0 0.0
        %368 = vmatprep.subr.mxu0 0.0
        %369 = vmatpush1.xpose.msra.mxu0 0.0
        %370 = vmatprep.subr.mxu0 0.0
        %371 = vmatpush1.xpose.msra.mxu0 0.0
        %372 = vmatprep.subr.mxu0 0.0
        %373 = vmatpush1.xpose.msra.mxu0 0.0
        %374 = vmatprep.subr.mxu0 0.0
        %375 = vmatpush1.xpose.msra.mxu0 0.0
        %376 = vmatprep.subr.mxu0 0.0
        %377 = vmatpush1.xpose.msra.mxu0 0.0
        %378 = vmatprep.subr.mxu0 0.0
        %379 = vmatpush1.xpose.msra.mxu0 0.0
        %380 = vmatprep.subr.mxu0 0.0
        %381 = vmatpush1.xpose.msra.mxu0 0.0
        %382 = vmatprep.subr.mxu0 0.0
        %383 = vmatpush1.xpose.msra.mxu0 0.0
        %384 = vmatprep.mubr.f32.mxu0 %v283
        %385 = vmatmul.mubr.f32.gmra.mrb[0].mxu0 %v282
        %v386 = vpop.f32.mrb[0].mxu0
        %v387 = vadd.f32 0.0, %v386
        %v388 = vpop.f32.mrb[0].mxu0
        %389 = vmatprep.mubr.f32.mxu0 %v285
        %390 = vmatmul.mubr.f32.gmra.mrb[0].mxu0 %v284
        %v391 = vpop.f32.mrb[0].mxu0
        %v392 = vadd.f32 0.0, %v391
        %v393 = vpop.f32.mrb[0].mxu0
        %394 = vdwg.mxu0
        %v395 = vadd.f32 %v318, %v387
        %v396 = vadd.f32 %v319, %v392
        %397 = vst [vmem:[#allocation2] sm:$0xff] %v395
        %398 = vst [vmem:[#allocation2 + $0x8] sm:$0xff] %v396
        %v399 = vld [vmem:[#allocation3] sm:$0xff]
        %v400 = vld [vmem:[#allocation3 + $0x8] sm:$0xff]
        %v401 = vmul.f32 %v282, %v282
        %v402 = vmul.f32 %v283, %v283
        %v403 = vmul.f32 %v284, %v284
        %v404 = vmul.f32 %v285, %v285
        %v405 = vadd.f32 %v401, %v402
        %406 = vadd.xlane.f32.xlu0 %v405
        %v407 = vpop.xlane.xlu0 %406
        %v408 = vadd.f32 %v403, %v404
        %409 = vadd.xlane.f32.xlu0 %v408
        %v410 = vpop.xlane.xlu0 %409
        %v411 = vadd.f32 %v399, %v407
        %v412 = vadd.f32 %v400, %v410
        %vm413 = vcmask 7168
        %414 = vst.msk [vmem:[#allocation3] sm:$0xff] %vm413, %v411
        %415 = vst.msk [vmem:[#allocation3 + $0x8] sm:$0xff] %vm413, %v412
        %v416 = vld [vmem:[#allocation4] sm:$0xff]
        %v417 = vmul.f32 %v286, %v286
        %v418 = vmul.f32 %v287, %v287
        %v419 = vmul.f32 %v288, %v288
        %v420 = vmul.f32 %v289, %v289
        %v421 = vmul.f32 %v290, %v290
        %v422 = vmul.f32 %v291, %v291
        %v423 = vmul.f32 %v292, %v292
        %v424 = vmul.f32 %v293, %v293
        %v425 = vmul.f32 %v294, %v294
        %v426 = vmul.f32 %v295, %v295
        %v427 = vmul.f32 %v296, %v296
        %v428 = vmul.f32 %v297, %v297
        %v429 = vmul.f32 %v298, %v298
        %v430 = vmul.f32 %v299, %v299
        %v431 = vmul.f32 %v300, %v300
        %v432 = vmul.f32 %v301, %v301
        %v433 = vmul.f32 %v302, %v302
        %v434 = vmul.f32 %v303, %v303
        %v435 = vmul.f32 %v304, %v304
        %v436 = vmul.f32 %v305, %v305
        %v437 = vmul.f32 %v306, %v306
        %v438 = vmul.f32 %v307, %v307
        %v439 = vmul.f32 %v308, %v308
        %v440 = vmul.f32 %v309, %v309
        %v441 = vmul.f32 %v310, %v310
        %v442 = vmul.f32 %v311, %v311
        %v443 = vmul.f32 %v312, %v312
        %v444 = vmul.f32 %v313, %v313
        %v445 = vmul.f32 %v314, %v314
        %v446 = vmul.f32 %v315, %v315
        %v447 = vmul.f32 %v316, %v316
        %v448 = vmul.f32 %v317, %v317
        %449 = vmatprep.subr.mxu0 %v418
        %450 = vmatpush1.xpose.msra.mxu0 %v417
        %451 = vmatprep.subr.mxu0 %v420
        %452 = vmatpush1.xpose.msra.mxu0 %v419
        %453 = vmatprep.subr.mxu0 %v422
        %454 = vmatpush1.xpose.msra.mxu0 %v421
        %455 = vmatprep.subr.mxu0 %v424
        %456 = vmatpush1.xpose.msra.mxu0 %v423
        %457 = vmatprep.subr.mxu0 %v426
        %458 = vmatpush1.xpose.msra.mxu0 %v425
        %459 = vmatprep.subr.mxu0 %v428
        %460 = vmatpush1.xpose.msra.mxu0 %v427
        %461 = vmatprep.subr.mxu0 %v430
        %462 = vmatpush1.xpose.msra.mxu0 %v429
        %463 = vmatprep.subr.mxu0 %v432
        %464 = vmatpush1.xpose.msra.mxu0 %v431
        %465 = vmatprep.subr.mxu0 %v434
        %466 = vmatpush1.xpose.msra.mxu0 %v433
        %467 = vmatprep.subr.mxu0 %v436
        %468 = vmatpush1.xpose.msra.mxu0 %v435
        %469 = vmatprep.subr.mxu0 %v438
        %470 = vmatpush1.xpose.msra.mxu0 %v437
        %471 = vmatprep.subr.mxu0 %v440
        %472 = vmatpush1.xpose.msra.mxu0 %v439
        %473 = vmatprep.subr.mxu0 %v442
        %474 = vmatpush1.xpose.msra.mxu0 %v441
        %475 = vmatprep.subr.mxu0 %v444
        %476 = vmatpush1.xpose.msra.mxu0 %v443
        %477 = vmatprep.subr.mxu0 %v446
        %478 = vmatpush1.xpose.msra.mxu0 %v445
        %479 = vmatprep.subr.mxu0 %v448
        %480 = vmatpush1.xpose.msra.mxu0 %v447
        %481 = vmatprep.subr.mxu0 0.0
        %482 = vmatpush1.xpose.msra.mxu0 0.0
        %483 = vmatprep.subr.mxu0 0.0
        %484 = vmatpush1.xpose.msra.mxu0 0.0
        %485 = vmatprep.subr.mxu0 0.0
        %486 = vmatpush1.xpose.msra.mxu0 0.0
        %487 = vmatprep.subr.mxu0 0.0
        %488 = vmatpush1.xpose.msra.mxu0 0.0
        %489 = vmatprep.subr.mxu0 0.0
        %490 = vmatpush1.xpose.msra.mxu0 0.0
        %491 = vmatprep.subr.mxu0 0.0
        %492 = vmatpush1.xpose.msra.mxu0 0.0
        %493 = vmatprep.subr.mxu0 0.0
        %494 = vmatpush1.xpose.msra.mxu0 0.0
        %495 = vmatprep.subr.mxu0 0.0
        %496 = vmatpush1.xpose.msra.mxu0 0.0
        %497 = vmatprep.subr.mxu0 0.0
        %498 = vmatpush1.xpose.msra.mxu0 0.0
        %499 = vmatprep.subr.mxu0 0.0
        %500 = vmatpush1.xpose.msra.mxu0 0.0
        %501 = vmatprep.subr.mxu0 0.0
        %502 = vmatpush1.xpose.msra.mxu0 0.0
        %503 = vmatprep.subr.mxu0 0.0
        %504 = vmatpush1.xpose.msra.mxu0 0.0
        %505 = vmatprep.subr.mxu0 0.0
        %506 = vmatpush1.xpose.msra.mxu0 0.0
        %507 = vmatprep.subr.mxu0 0.0
        %508 = vmatpush1.xpose.msra.mxu0 0.0
        %509 = vmatprep.subr.mxu0 0.0
        %510 = vmatpush1.xpose.msra.mxu0 0.0
        %511 = vmatprep.subr.mxu0 0.0
        %512 = vmatpush1.xpose.msra.mxu0 0.0
        %513 = vmatprep.mubr.f32.mxu0 1.0
        %514 = vmatmul.mubr.f32.gmra.mrb[0].mxu0 1.0
        %v515 = vpop.f32.mrb[0].mxu0
        %v516 = vadd.f32 0.0, %v515
        %v517 = vpop.f32.mrb[0].mxu0
        %518 = vdwg.mxu0
        %v519 = vadd.f32 %v416, %v516
        %520 = vst [vmem:[#allocation4] sm:$0xff] %v519
        %p521 = scmp.eq.s32.totalorder %s28, 1
        // Predicated region
        $region45: #{tpu_custom_call.1} parent=31 // pred_check
          %p522 = pneg %p521
        $region46: #{tpu_custom_call.1} parent=31 // pred_check_branch
          %524 = sbr.rel (%p522) target = $region48
        $region47: #{tpu_custom_call.1} parent=31 // pred_region
          %v525 = vld [vmem:[#allocation3] sm:$0xff]
          %v526 = vld [vmem:[#allocation3 + $0x8] sm:$0xff]
          %v527 = vrsqrt.pop %v525
          %v528 = vmul.f32 %v525, %v527
          %vm529 = vcmp.eq.f32.partialorder %v525, inf
          %v530 = vsel %vm529, %v525, %v528
          %vm531 = vcmp.eq.f32.partialorder %v525, 0.0
          %v532 = vand.u32 %v525, 2147483648
          %v533 = vsel %vm531, %v532, %v530
          %v534 = vrsqrt.pop %v526
          %v535 = vmul.f32 %v526, %v534
          %vm536 = vcmp.eq.f32.partialorder %v526, inf
          %v537 = vsel %vm536, %v526, %v535
          %vm538 = vcmp.eq.f32.partialorder %v526, 0.0
          %v539 = vand.u32 %v526, 2147483648
          %v540 = vsel %vm538, %v539, %v537
          %v541 = vadd.f32 %v533, 0.0001
          %v542 = vadd.f32 %v540, 0.0001
          %v543 = vrcp.pop %v541
          %v544 = vmul.f32 1.0, %v543
          %v545 = vrcp.pop %v542
          %v546 = vmul.f32 1.0, %v545
          %v547 = vld [vmem:[#allocation4] sm:$0x1]
          %v548 = vrsqrt.pop %v547
          %v549 = vmul.f32 %v547, %v548
          %vm550 = vcmp.eq.f32.partialorder %v547, inf
          %v551 = vsel %vm550, %v547, %v549
          %vm552 = vcmp.eq.f32.partialorder %v547, 0.0
          %v553 = vand.u32 %v547, 2147483648
          %v554 = vsel %vm552, %v553, %v551
          %v555 = vld [vmem:[%s270] sm:$0x1]
          %vm556 = vcmp.gt.f32.partialorder %v554, 0.0
          %v557 = vrcp.pop %v554
          %v558 = vmul.f32 %v555, %v557
          %v559 = vsel %vm556, %v558, 0.0
          %v560 = vld [vmem:[#allocation2] sm:$0xff]
          %v561 = vld [vmem:[#allocation2 + $0x8] sm:$0xff]
          %v562 = vmul.f32 %v560, 2.0
          %v563 = vmul.f32 %v561, 2.0
          %565 = vset.pattern.permute.xlu0 0
          %566 = vperm.xlu0 %565, %v544
          %v567 = vpop.permute.xlu0 %566
          %570 = vset.pattern.permute.xlu0 0
          %571 = vperm.xlu0 %570, %v546
          %v572 = vpop.permute.xlu0 %571
          %v574 = vmul.f32 %v562, %v567
          %v575 = vmul.f32 %v563, %v572
          %v576 = vlaneseq
          %v577 = vshrl.u32 %v576, 7
          %v578 = vsub.s32 0, %v577
          %v579 = vrot.slane %v559, %v578
          %v580 = vmul.f32 %v574, %v579
          %v581 = vmul.f32 %v575, %v579
          %582 = vst [vmem:[#allocation10] sm:$0xff] %v580
          %583 = vst [vmem:[#allocation10 + $0x8] sm:$0xff] %v581
        $region48: #{tpu_custom_call.1} parent=31 // pred_fallthru
          _
        // Predicated region
        $region49: #{tpu_custom_call.1} parent=31 // pred_check
          %p584 = pneg %p142
        $region50: #{tpu_custom_call.1} parent=31 // pred_check_branch
          %586 = sbr.rel (%p584) target = $region52
        $region51: #{tpu_custom_call.1} parent=31 // pred_region
          %s587 = smul.u32 2, %s26
          %s589 = ssub.s32 256, 256
          %590 = vsyncadd [#allocation7], %s589
          %s591 = sadd.s32 %s27, %s587
          %s592 = smul.addr %s591, 128
          %s593 = scalar_lea.hbm %s3, %s592
          %s594 = sshll.u32 [#allocation10], 4
          %s595 = int_to_ptr.vmem [resolvable:$true] %s594
          %600 = dma.vmem_to_hbm [thread:$0]  %s595, 256, %s593, [#allocation7], 128, 128, 8
        $region52: #{tpu_custom_call.1} parent=31 // pred_fallthru
          _
        // Predicated region
        $region53: #{tpu_custom_call.1} parent=31 // pred_check
          %p601 = pneg %p142
        $region54: #{tpu_custom_call.1} parent=31 // pred_check_branch
          %603 = sbr.rel (%p601) target = $region56
        $region55: #{tpu_custom_call.1} parent=31 // pred_region
          %604 = dma.done [#allocation7], 256
        $region56: #{tpu_custom_call.1} parent=31 // pred_fallthru
          _
      $region32: #{tpu_custom_call.1} parent=5 // pred_fallthru
        _
      %p605 = scmp.le.s32.totalorder 2, %s16
      // Predicated region
      $region57: #{tpu_custom_call.1} parent=5 // pred_check
        %p606 = pneg %p605
      $region58: #{tpu_custom_call.1} parent=5 // pred_check_branch
        %608 = sbr.rel (%p606) target = $region60
      $region59: #{tpu_custom_call.1} parent=5 // pred_region
        %s609 = ssub.s32 %s16, 2
      $region60: #{tpu_custom_call.1} parent=5 // pred_fallthru
        _
    $region6: #{tpu_custom_call.1} parent=1 // loop_footer
      %s20 = sadd.s32 1, %s16
    $region7: #{tpu_custom_call.1} parent=1 // loop_footer_branch
      %15 = sbr.rel target = $region3
    $region8: #{tpu_custom_call.1} parent=1 // loop_exit
      _
    %610 = vsyncpa [#allocation6], 1
    %s611 = scalar_lea.sflag [#allocation6], 1
    %612 = vsyncpa %s611, 1
    %613 = vsyncpa [#allocation9], 1
    %s614 = scalar_lea.sflag [#allocation9], 1
    %615 = vsyncpa %s614, 1
    %616 = vsyncpa [#allocation7], 1
    %s617 = scalar_lea.sflag [#allocation7], 1
    %618 = vsyncpa %s617, 1

</llo_original>
